<compile_context>
chip_gen: v7x
topology: tpu7x:2x2x1
jax: 0.10.0
libtpu: 0.0.40
codegen_flags: <defaults>
</compile_context>

<pallas_src>
import jax
import jax.numpy as jnp
from jax.experimental import pallas as pl
from jax.experimental.pallas import tpu as pltpu

_PACK = 8            # original rows packed per kernel row (lane-dense output)
_BLOCK_ROWS = 2048   # original rows per grid step (256 packed rows per block)


def _round_up(x, m):
    return (x + m - 1) // m * m


def _event_encoder_kernel(
    tpk_ref, spk_ref,                 # packed time [B,8], packed state [B,16]
    wt_ref, ws_ref, bin_ref,          # packed first-layer weights/bias
    we1_ref, be1_ref,                 # packed encoder Linear(2H, H)
    we2_ref, be2_ref,                 # packed encoder Linear(H, head)
    out_ref,                          # packed output [B, 8*head]
):
    # Fused temporal + spatial first layer (concat is baked into the packed
    # block-diagonal weights): one bias-add + ReLU VPU pass over 8*2H lanes.
    emb = jnp.dot(tpk_ref[...], wt_ref[...], preferred_element_type=jnp.float32)
    emb = emb + jnp.dot(spk_ref[...], ws_ref[...], preferred_element_type=jnp.float32)
    emb = jnp.maximum(emb + bin_ref[...], 0.0)

    # Encoder layer 1: ReLU(emb @ W_e1 + b_e1)   (block-diag packed)
    h = jnp.dot(emb, we1_ref[...], preferred_element_type=jnp.float32) + be1_ref[...]
    h = jnp.maximum(h, 0.0)

    # Encoder layer 2 (no activation): h @ W_e2 + b_e2  -> lane-dense [B, 8*head]
    out = jnp.dot(h, we2_ref[...], preferred_element_type=jnp.float32) + be2_ref[...]
    out_ref[...] = out.astype(out_ref.dtype)


def init_event_encoder_params(key, hidden_dim, head_dim, dtype=jnp.float32):
    """Deterministic synthetic params matching nn.Linear shapes (stored transposed: [in, out])."""
    ks = jax.random.split(key, 8)

    def lin(kw, kb, fan_in, fan_out):
        bound = 1.0 / jnp.sqrt(jnp.asarray(fan_in, dtype))
        w = jax.random.uniform(kw, (fan_in, fan_out), dtype, -bound, bound)
        b = jax.random.uniform(kb, (1, fan_out), dtype, -bound, bound)
        return w, b

    w_s, b_s = lin(ks[0], ks[1], 2, hidden_dim)                 # spatial Linear(2, H)
    w_t, b_t = lin(ks[2], ks[3], 1, hidden_dim)                 # temporal Linear(1, H)
    w_e1, b_e1 = lin(ks[4], ks[5], 2 * hidden_dim, hidden_dim)  # encoder[0] Linear(2H, H)
    w_e2, b_e2 = lin(ks[6], ks[7], hidden_dim, head_dim)        # encoder[2] Linear(H, D)
    return dict(w_s=w_s, b_s=b_s, w_t=w_t, b_t=b_t,
                w_e1=w_e1, b_e1=b_e1, w_e2=w_e2, b_e2=b_e2)


@jax.jit
def event_encoder_forward(state, time, params):
    """state: [..., 2], time: [..., 1] -> out: [..., head_dim]."""
    lead = state.shape[:-1]
    n = 1
    for d in lead:
        n *= d
    hidden = params["w_s"].shape[1]
    head = params["w_e2"].shape[1]

    state2d = state.reshape(n, 2).astype(jnp.float32)
    time2d = time.reshape(n, 1).astype(jnp.float32)

    # ---- choose row block & pad N (tail block handled by padding + final slice) ----
    block_rows = min(_BLOCK_ROWS, _round_up(n, _PACK))
    block_rows = _round_up(block_rows, _PACK)
    n_pad = _round_up(n, block_rows)
    if n_pad != n:
        pad = n_pad - n
        state2d = jnp.pad(state2d, ((0, pad), (0, 0)))
        time2d = jnp.pad(time2d, ((0, pad), (0, 0)))

    rows_p = n_pad // _PACK          # packed rows total
    blk_p = block_rows // _PACK      # packed rows per grid step
    out_lanes = _PACK * head         # 8 * 16 = 128 -> lane-dense stores

    # ---- free row-major "pack by 8" reshapes (bitcasts, no data movement) ----
    tpk = time2d.reshape(rows_p, _PACK)           # [N/8, 8]
    spk = state2d.reshape(rows_p, 2 * _PACK)      # [N/8, 16]

    # ---- pack weights block-diagonally: kron(I_8, W) ----
    eye = jnp.eye(_PACK, dtype=jnp.float32)
    wt_p = jnp.kron(eye, jnp.concatenate(
        [params["w_t"], jnp.zeros((1, hidden), jnp.float32)], axis=1))   # [8,  8*2H]
    ws_p = jnp.kron(eye, jnp.concatenate(
        [jnp.zeros((2, hidden), jnp.float32), params["w_s"]], axis=1))   # [16, 8*2H]
    bin_p = jnp.tile(jnp.concatenate([params["b_t"], params["b_s"]], axis=1),
                     (1, _PACK))                                         # [1,  8*2H]
    we1_p = jnp.kron(eye, params["w_e1"])                                # [8*2H, 8*H]
    be1_p = jnp.tile(params["b_e1"], (1, _PACK))                         # [1,  8*H]
    we2_p = jnp.kron(eye, params["w_e2"])                                # [8*H, 8*head]
    be2_p = jnp.tile(params["b_e2"], (1, _PACK))                         # [1,  8*head]

    grid = (n_pad // block_rows,)

    row_map = lambda i: (i, 0)      # activations: march over row blocks
    const_map = lambda i: (0, 0)    # weights/biases: VMEM-resident, no re-fetch

    # Advisory cost estimate (true packed FLOPs + HBM bytes).
    flops = 2 * rows_p * (
        _PACK * (2 * _PACK * hidden)
        + (2 * _PACK) * (2 * _PACK * hidden)
        + (2 * _PACK * hidden) * (_PACK * hidden)
        + (_PACK * hidden) * out_lanes)
    bytes_accessed = 4 * (tpk.size + spk.size + rows_p * out_lanes
                          + wt_p.size + ws_p.size + bin_p.size
                          + we1_p.size + be1_p.size + we2_p.size + be2_p.size)

    out_packed = pl.pallas_call(
        _event_encoder_kernel,
        out_shape=jax.ShapeDtypeStruct((rows_p, out_lanes), jnp.float32),
        grid=grid,
        in_specs=[
            pl.BlockSpec((blk_p, _PACK), row_map),
            pl.BlockSpec((blk_p, 2 * _PACK), row_map),
            pl.BlockSpec(wt_p.shape, const_map),
            pl.BlockSpec(ws_p.shape, const_map),
            pl.BlockSpec(bin_p.shape, const_map),
            pl.BlockSpec(we1_p.shape, const_map),
            pl.BlockSpec(be1_p.shape, const_map),
            pl.BlockSpec(we2_p.shape, const_map),
            pl.BlockSpec(be2_p.shape, const_map),
        ],
        out_specs=pl.BlockSpec((blk_p, out_lanes), row_map),
        compiler_params=pltpu.CompilerParams(
            dimension_semantics=("parallel",)),
        cost_estimate=pl.CostEstimate(
            flops=flops, transcendentals=0, bytes_accessed=bytes_accessed),
    )(tpk, spk, wt_p, ws_p, bin_p, we1_p, be1_p, we2_p, be2_p)

    out2d = out_packed.reshape(n_pad, head)[:n]   # free reshape + drop padded tail
    return out2d.reshape(*lead, head)


def _reference_forward(state, time, params):
    """Pure-JAX reference mirroring the PyTorch module exactly."""
    emb_state = jax.nn.relu(state @ params["w_s"] + params["b_s"][0])
    emb_time = jax.nn.relu(time @ params["w_t"] + params["b_t"][0])
    cat = jnp.concatenate([emb_time, emb_state], axis=-1)
    h = jax.nn.relu(cat @ params["w_e1"] + params["b_e1"][0])
    return h @ params["w_e2"] + params["b_e2"][0]


if __name__ == "__main__":
    hidden_dim = 32
    head_dim = 16
    batch, seq = 2, 8

    key = jax.random.PRNGKey(0)
    k_params, k_state, k_time = jax.random.split(key, 3)

    params = init_event_encoder_params(k_params, hidden_dim, head_dim)

    state = jax.random.normal(k_state, (batch, seq, 2), dtype=jnp.float32)
    time = jax.random.normal(k_time, (batch, seq, 1), dtype=jnp.float32)

    out = event_encoder_forward(state, time, params)
    out = jax.block_until_ready(out)

    ref = _reference_forward(state, time, params)
    assert out.shape == (batch, seq, head_dim), out.shape
    assert jnp.allclose(out, ref, atol=1e-5, rtol=1e-5), "mismatch vs reference"

    print("KERNEL_OK")
</pallas_src>

<mosaic_0001>
module attributes {stable_mosaic.version = 11 : i64} {
  func.func @_event_encoder_kernel(%arg0: i32, %arg1: memref<2x8xf32, #tpu.memory_space<vmem>>, %arg2: memref<2x16xf32, #tpu.memory_space<vmem>>, %arg3: memref<8x512xf32, #tpu.memory_space<vmem>>, %arg4: memref<16x512xf32, #tpu.memory_space<vmem>>, %arg5: memref<1x512xf32, #tpu.memory_space<vmem>>, %arg6: memref<512x256xf32, #tpu.memory_space<vmem>>, %arg7: memref<1x256xf32, #tpu.memory_space<vmem>>, %arg8: memref<256x128xf32, #tpu.memory_space<vmem>>, %arg9: memref<1x128xf32, #tpu.memory_space<vmem>>, %arg10: memref<2x128xf32, #tpu.memory_space<vmem>>) attributes {dimension_semantics = [#tpu.dimension_semantics<parallel>], iteration_bounds = array<i64: 1>, scalar_prefetch = 0 : i64, scratch_operands = 0 : i64, tpu.core_type = #tpu.core_type<tc>, window_params = [{transform_indices = @transform_0, window_bounds = array<i64: 2, 8>}, {transform_indices = @transform_1, window_bounds = array<i64: 2, 16>}, {pipeline_mode = #tpu.pipeline_mode<synchronous>, transform_indices = @transform_2, window_bounds = array<i64: 8, 512>}, {pipeline_mode = #tpu.pipeline_mode<synchronous>, transform_indices = @transform_3, window_bounds = array<i64: 16, 512>}, {pipeline_mode = #tpu.pipeline_mode<synchronous>, transform_indices = @transform_4, window_bounds = array<i64: 1, 512>}, {pipeline_mode = #tpu.pipeline_mode<synchronous>, transform_indices = @transform_5, window_bounds = array<i64: 512, 256>}, {pipeline_mode = #tpu.pipeline_mode<synchronous>, transform_indices = @transform_6, window_bounds = array<i64: 1, 256>}, {pipeline_mode = #tpu.pipeline_mode<synchronous>, transform_indices = @transform_7, window_bounds = array<i64: 256, 128>}, {pipeline_mode = #tpu.pipeline_mode<synchronous>, transform_indices = @transform_8, window_bounds = array<i64: 1, 128>}, {transform_indices = @transform_9, window_bounds = array<i64: 2, 128>}]} {
    %c0 = arith.constant 0 : index
    %c0_0 = arith.constant 0 : index
    %0 = vector.load %arg1[%c0, %c0_0] : memref<2x8xf32, #tpu.memory_space<vmem>>, vector<2x8xf32>
    %c0_1 = arith.constant 0 : index
    %c0_2 = arith.constant 0 : index
    %1 = vector.load %arg3[%c0_1, %c0_2] : memref<8x512xf32, #tpu.memory_space<vmem>>, vector<8x512xf32>
    %cst = arith.constant dense<0.000000e+00> : vector<2x512xf32>
    %2 = tpu.matmul %0, %1, %cst {dimension_numbers = #tpu.dot_dimension_numbers<[1], [0], [0], [1], [0, 0, 1, 1], [], []>} : vector<2x8xf32>, vector<8x512xf32>, vector<2x512xf32> -> vector<2x512xf32>
    %c0_3 = arith.constant 0 : index
    %c0_4 = arith.constant 0 : index
    %3 = vector.load %arg2[%c0_3, %c0_4] : memref<2x16xf32, #tpu.memory_space<vmem>>, vector<2x16xf32>
    %c0_5 = arith.constant 0 : index
    %c0_6 = arith.constant 0 : index
    %4 = vector.load %arg4[%c0_5, %c0_6] : memref<16x512xf32, #tpu.memory_space<vmem>>, vector<16x512xf32>
    %cst_7 = arith.constant dense<0.000000e+00> : vector<2x512xf32>
    %5 = tpu.matmul %3, %4, %cst_7 {dimension_numbers = #tpu.dot_dimension_numbers<[1], [0], [0], [1], [0, 0, 1, 1], [], []>} : vector<2x16xf32>, vector<16x512xf32>, vector<2x512xf32> -> vector<2x512xf32>
    %6 = arith.addf %2, %5 : vector<2x512xf32>
    %c0_8 = arith.constant 0 : index
    %c0_9 = arith.constant 0 : index
    %7 = vector.load %arg5[%c0_8, %c0_9] : memref<1x512xf32, #tpu.memory_space<vmem>>, vector<1x512xf32>
    %8 = vector.broadcast %7 : vector<1x512xf32> to vector<2x512xf32>
    %9 = arith.addf %6, %8 : vector<2x512xf32>
    %cst_10 = arith.constant 0.000000e+00 : f32
    %10 = vector.broadcast %cst_10 : f32 to vector<2x512xf32>
    %11 = arith.maximumf %9, %10 : vector<2x512xf32>
    %c0_11 = arith.constant 0 : index
    %c0_12 = arith.constant 0 : index
    %12 = vector.load %arg6[%c0_11, %c0_12] : memref<512x256xf32, #tpu.memory_space<vmem>>, vector<512x256xf32>
    %cst_13 = arith.constant dense<0.000000e+00> : vector<2x256xf32>
    %13 = tpu.matmul %11, %12, %cst_13 {dimension_numbers = #tpu.dot_dimension_numbers<[1], [0], [0], [1], [0, 0, 1, 1], [], []>} : vector<2x512xf32>, vector<512x256xf32>, vector<2x256xf32> -> vector<2x256xf32>
    %c0_14 = arith.constant 0 : index
    %c0_15 = arith.constant 0 : index
    %14 = vector.load %arg7[%c0_14, %c0_15] : memref<1x256xf32, #tpu.memory_space<vmem>>, vector<1x256xf32>
    %15 = vector.broadcast %14 : vector<1x256xf32> to vector<2x256xf32>
    %16 = arith.addf %13, %15 : vector<2x256xf32>
    %cst_16 = arith.constant 0.000000e+00 : f32
    %17 = vector.broadcast %cst_16 : f32 to vector<2x256xf32>
    %18 = arith.maximumf %16, %17 : vector<2x256xf32>
    %c0_17 = arith.constant 0 : index
    %c0_18 = arith.constant 0 : index
    %19 = vector.load %arg8[%c0_17, %c0_18] : memref<256x128xf32, #tpu.memory_space<vmem>>, vector<256x128xf32>
    %cst_19 = arith.constant dense<0.000000e+00> : vector<2x128xf32>
    %20 = tpu.matmul %18, %19, %cst_19 {dimension_numbers = #tpu.dot_dimension_numbers<[1], [0], [0], [1], [0, 0, 1, 1], [], []>} : vector<2x256xf32>, vector<256x128xf32>, vector<2x128xf32> -> vector<2x128xf32>
    %c0_20 = arith.constant 0 : index
    %c0_21 = arith.constant 0 : index
    %21 = vector.load %arg9[%c0_20, %c0_21] : memref<1x128xf32, #tpu.memory_space<vmem>>, vector<1x128xf32>
    %22 = vector.broadcast %21 : vector<1x128xf32> to vector<2x128xf32>
    %23 = arith.addf %20, %22 : vector<2x128xf32>
    %c0_22 = arith.constant 0 : index
    %c0_23 = arith.constant 0 : index
    %24 = vector.load %arg10[%c0_22, %c0_23] : memref<2x128xf32, #tpu.memory_space<vmem>>, vector<2x128xf32>
    tpu.vector_store %arg10[%c0_22, %c0_23], %23 {strides = array<i32>} : memref<2x128xf32, #tpu.memory_space<vmem>>, vector<2x128xf32>,
    return
  }
  func.func @transform_0(%arg0: i32) -> (i32, i32) {
    %c0_i32 = arith.constant 0 : i32
    %c0_i32_0 = arith.constant 0 : i32
    return %arg0, %c0_i32 : i32, i32
  }
  func.func @transform_1(%arg0: i32) -> (i32, i32) {
    %c0_i32 = arith.constant 0 : i32
    %c0_i32_0 = arith.constant 0 : i32
    return %arg0, %c0_i32 : i32, i32
  }
  func.func @transform_2(%arg0: i32) -> (i32, i32) {
    %c0_i32 = arith.constant 0 : i32
    %c0_i32_0 = arith.constant 0 : i32
    %c0_i32_1 = arith.constant 0 : i32
    return %c0_i32, %c0_i32_0 : i32, i32
  }
  func.func @transform_3(%arg0: i32) -> (i32, i32) {
    %c0_i32 = arith.constant 0 : i32
    %c0_i32_0 = arith.constant 0 : i32
    %c0_i32_1 = arith.constant 0 : i32
    return %c0_i32, %c0_i32_0 : i32, i32
  }
  func.func @transform_4(%arg0: i32) -> (i32, i32) {
    %c0_i32 = arith.constant 0 : i32
    %c0_i32_0 = arith.constant 0 : i32
    %c0_i32_1 = arith.constant 0 : i32
    return %c0_i32, %c0_i32_0 : i32, i32
  }
  func.func @transform_5(%arg0: i32) -> (i32, i32) {
    %c0_i32 = arith.constant 0 : i32
    %c0_i32_0 = arith.constant 0 : i32
    %c0_i32_1 = arith.constant 0 : i32
    return %c0_i32, %c0_i32_0 : i32, i32
  }
  func.func @transform_6(%arg0: i32) -> (i32, i32) {
    %c0_i32 = arith.constant 0 : i32
    %c0_i32_0 = arith.constant 0 : i32
    %c0_i32_1 = arith.constant 0 : i32
    return %c0_i32, %c0_i32_0 : i32, i32
  }
  func.func @transform_7(%arg0: i32) -> (i32, i32) {
    %c0_i32 = arith.constant 0 : i32
    %c0_i32_0 = arith.constant 0 : i32
    %c0_i32_1 = arith.constant 0 : i32
    return %c0_i32, %c0_i32_0 : i32, i32
  }
  func.func @transform_8(%arg0: i32) -> (i32, i32) {
    %c0_i32 = arith.constant 0 : i32
    %c0_i32_0 = arith.constant 0 : i32
    %c0_i32_1 = arith.constant 0 : i32
    return %c0_i32, %c0_i32_0 : i32, i32
  }
  func.func @transform_9(%arg0: i32) -> (i32, i32) {
    %c0_i32 = arith.constant 0 : i32
    %c0_i32_0 = arith.constant 0 : i32
    return %arg0, %c0_i32 : i32, i32
  }
}

</mosaic_0001>

<llo_original>
// kernel: event_encoder_forward.1
$region0: #{event_encoder_forward.1}
  #allocation0 [shape = 'u32[]', space=smem, size = 0x4, offset = 0x4, fixed_abs, tag = 'smem constant byte address 0x4 - core index']
  #allocation1 [shape = 'u32[144,128]{1,0:T(1,128)}', space=vmem, size = 0x12000, scoped, tag = 'internal scratch']
  %s0 = inlined_call_operand.vmem [shape: f32[2,8], index: 0, kind: input, shape index: {}]
  %s1 = inlined_call_operand.vmem [shape: f32[2,16], index: 1, kind: input, shape index: {}]
  %s2 = inlined_call_operand.vmem [shape: f32[8,512], index: 2, kind: input, shape index: {}]
  %s3 = inlined_call_operand.vmem [shape: f32[16,512], index: 3, kind: input, shape index: {}]
  %s4 = inlined_call_operand.vmem [shape: f32[1,512], index: 4, kind: input, shape index: {}]
  %s5 = inlined_call_operand.vmem [shape: f32[512,256], index: 5, kind: input, shape index: {}]
  %s6 = inlined_call_operand.vmem [shape: f32[1,256], index: 6, kind: input, shape index: {}]
  %s7 = inlined_call_operand.vmem [shape: f32[256,128], index: 7, kind: input, shape index: {}]
  %s8 = inlined_call_operand.vmem [shape: f32[1,128], index: 8, kind: input, shape index: {}]
  %s9 = inlined_call_operand.vmem [shape: f32[2,128], index: 9, kind: output, shape index: {}]
  %s10 = sld [smem:[#allocation0]]
  $region46: #{event_encoder_forward.1} parent=0
    _
  %s12 = ssub.s32 1, %s10
  %s13 = scalar_select 0, %s12, %s10
  // Predicated region
  $region2: #{event_encoder_forward.1} parent=0 // pred_check
    _
  $region3: #{event_encoder_forward.1} parent=0 // pred_check_branch
    %15 = sbr.rel (0) target = $region5
  $region4: #{event_encoder_forward.1} parent=0 // pred_region
    _
  $region5: #{event_encoder_forward.1} parent=0 // pred_fallthru
    _
  // Predicated region
  $region6: #{event_encoder_forward.1} parent=0 // pred_check
    _
  $region7: #{event_encoder_forward.1} parent=0 // pred_check_branch
    %17 = sbr.rel (0) target = $region9
  $region8: #{event_encoder_forward.1} parent=0 // pred_region
    _
  $region9: #{event_encoder_forward.1} parent=0 // pred_fallthru
    _
  // Predicated region
  $region10: #{event_encoder_forward.1} parent=0 // pred_check
    _
  $region11: #{event_encoder_forward.1} parent=0 // pred_check_branch
    %19 = sbr.rel (0) target = $region13
  $region12: #{event_encoder_forward.1} parent=0 // pred_region
    _
  $region13: #{event_encoder_forward.1} parent=0 // pred_fallthru
    _
  // Predicated region
  $region14: #{event_encoder_forward.1} parent=0 // pred_check
    _
  $region15: #{event_encoder_forward.1} parent=0 // pred_check_branch
    %21 = sbr.rel (0) target = $region17
  $region16: #{event_encoder_forward.1} parent=0 // pred_region
    _
  $region17: #{event_encoder_forward.1} parent=0 // pred_fallthru
    _
  // Predicated region
  $region18: #{event_encoder_forward.1} parent=0 // pred_check
    _
  $region19: #{event_encoder_forward.1} parent=0 // pred_check_branch
    %23 = sbr.rel (0) target = $region21
  $region20: #{event_encoder_forward.1} parent=0 // pred_region
    _
  $region21: #{event_encoder_forward.1} parent=0 // pred_fallthru
    _
  // Predicated region
  $region22: #{event_encoder_forward.1} parent=0 // pred_check
    _
  $region23: #{event_encoder_forward.1} parent=0 // pred_check_branch
    %25 = sbr.rel (0) target = $region25
  $region24: #{event_encoder_forward.1} parent=0 // pred_region
    _
  $region25: #{event_encoder_forward.1} parent=0 // pred_fallthru
    _
  // Predicated region
  $region26: #{event_encoder_forward.1} parent=0 // pred_check
    _
  $region27: #{event_encoder_forward.1} parent=0 // pred_check_branch
    %27 = sbr.rel (0) target = $region29
  $region28: #{event_encoder_forward.1} parent=0 // pred_region
    _
  $region29: #{event_encoder_forward.1} parent=0 // pred_fallthru
    _
  // Predicated region
  $region30: #{event_encoder_forward.1} parent=0 // pred_check
    _
  $region31: #{event_encoder_forward.1} parent=0 // pred_check_branch
    %29 = sbr.rel (0) target = $region33
  $region32: #{event_encoder_forward.1} parent=0 // pred_region
    _
  $region33: #{event_encoder_forward.1} parent=0 // pred_fallthru
    _
  // Predicated region
  $region34: #{event_encoder_forward.1} parent=0 // pred_check
    _
  $region35: #{event_encoder_forward.1} parent=0 // pred_check_branch
    %31 = sbr.rel (0) target = $region37
  $region36: #{event_encoder_forward.1} parent=0 // pred_region
    _
  $region37: #{event_encoder_forward.1} parent=0 // pred_fallthru
    _
  %v32 = vld [vmem:[%s0] sm:$0x3]
  %v33 = vld [vmem:[%s2] sm:$0xff]
  %v34 = vld [vmem:[%s2 + $0x8] sm:$0xff]
  %v35 = vld [vmem:[%s2 + $0x10] sm:$0xff]
  %v36 = vld [vmem:[%s2 + $0x18] sm:$0xff]
  %v37 = vld [vmem:[%s1] sm:$0x3]
  %v38 = vld [vmem:[%s3] sm:$0xff]
  %v39 = vld [vmem:[%s3 + $0x8] sm:$0xff]
  %v40 = vld [vmem:[%s3 + $0x10] sm:$0xff]
  %v41 = vld [vmem:[%s3 + $0x18] sm:$0xff]
  %v42 = vld [vmem:[%s3 + $0x20] sm:$0xff]
  %v43 = vld [vmem:[%s3 + $0x28] sm:$0xff]
  %v44 = vld [vmem:[%s3 + $0x30] sm:$0xff]
  %v45 = vld [vmem:[%s3 + $0x38] sm:$0xff]
  %vm46 = vcmask 130048
  %v48 = vsel %vm46, %v37, 0
  %50 = vmatprep.subr.mxu0 %v39
  %51 = vmatpush1.msra.mxu0 %v38
  %52 = vmatprep.subr.mxu0 %v43
  %53 = vmatpush1.msra.mxu0 %v42
  %54 = vmatprep.subr.mxu0 0.0
  %55 = vmatpush1.msra.mxu0 0.0
  %56 = vmatprep.subr.mxu0 0.0
  %57 = vmatpush1.msra.mxu0 0.0
  %58 = vmatprep.subr.mxu0 0.0
  %59 = vmatpush1.msra.mxu0 0.0
  %60 = vmatprep.subr.mxu0 0.0
  %61 = vmatpush1.msra.mxu0 0.0
  %62 = vmatprep.subr.mxu0 0.0
  %63 = vmatpush1.msra.mxu0 0.0
  %64 = vmatprep.subr.mxu0 0.0
  %65 = vmatpush1.msra.mxu0 0.0
  %66 = vmatprep.subr.mxu0 0.0
  %67 = vmatpush1.msra.mxu0 0.0
  %68 = vmatprep.subr.mxu0 0.0
  %69 = vmatpush1.msra.mxu0 0.0
  %70 = vmatprep.subr.mxu0 0.0
  %71 = vmatpush1.msra.mxu0 0.0
  %72 = vmatprep.subr.mxu0 0.0
  %73 = vmatpush1.msra.mxu0 0.0
  %74 = vmatprep.subr.mxu0 0.0
  %75 = vmatpush1.msra.mxu0 0.0
  %76 = vmatprep.subr.mxu0 0.0
  %77 = vmatpush1.msra.mxu0 0.0
  %78 = vmatprep.subr.mxu0 0.0
  %79 = vmatpush1.msra.mxu0 0.0
  %80 = vmatprep.subr.mxu0 0.0
  %81 = vmatpush1.msra.mxu0 0.0
  %82 = vmatprep.subr.mxu0 0.0
  %83 = vmatpush1.msra.mxu0 0.0
  %84 = vmatprep.subr.mxu0 0.0
  %85 = vmatpush1.msra.mxu0 0.0
  %86 = vmatprep.subr.mxu0 0.0
  %87 = vmatpush1.msra.mxu0 0.0
  %88 = vmatprep.subr.mxu0 0.0
  %89 = vmatpush1.msra.mxu0 0.0
  %90 = vmatprep.subr.mxu0 0.0
  %91 = vmatpush1.msra.mxu0 0.0
  %92 = vmatprep.subr.mxu0 0.0
  %93 = vmatpush1.msra.mxu0 0.0
  %94 = vmatprep.subr.mxu0 0.0
  %95 = vmatpush1.msra.mxu0 0.0
  %96 = vmatprep.subr.mxu0 0.0
  %97 = vmatpush1.msra.mxu0 0.0
  %98 = vmatprep.subr.mxu0 0.0
  %99 = vmatpush1.msra.mxu0 0.0
  %100 = vmatprep.subr.mxu0 0.0
  %101 = vmatpush1.msra.mxu0 0.0
  %102 = vmatprep.subr.mxu0 0.0
  %103 = vmatpush1.msra.mxu0 0.0
  %104 = vmatprep.subr.mxu0 0.0
  %105 = vmatpush1.msra.mxu0 0.0
  %106 = vmatprep.subr.mxu0 0.0
  %107 = vmatpush1.msra.mxu0 0.0
  %108 = vmatprep.subr.mxu0 0.0
  %109 = vmatpush1.msra.mxu0 0.0
  %110 = vmatprep.subr.mxu0 0.0
  %111 = vmatpush1.msra.mxu0 0.0
  %112 = vmatprep.subr.mxu0 0.0
  %113 = vmatpush1.msra.mxu0 0.0
  %114 = vmatprep.mubr.f32.mxu0 0.0
  %115 = vmatmul.mubr.f32.gmra.mrb[0].mxu0 %v48
  %v116 = vpop.f32.mrb[0].mxu0
  %v117 = vadd.f32 0.0, %v116
  %v118 = vpop.f32.mrb[0].mxu0
  %v119 = vadd.f32 0.0, %v118
  %120 = vdwg.mxu0
  %121 = vmatprep.subr.mxu0 %v41
  %122 = vmatpush1.msra.mxu0 %v40
  %123 = vmatprep.subr.mxu0 %v45
  %124 = vmatpush1.msra.mxu0 %v44
  %125 = vmatprep.subr.mxu0 0.0
  %126 = vmatpush1.msra.mxu0 0.0
  %127 = vmatprep.subr.mxu0 0.0
  %128 = vmatpush1.msra.mxu0 0.0
  %129 = vmatprep.subr.mxu0 0.0
  %130 = vmatpush1.msra.mxu0 0.0
  %131 = vmatprep.subr.mxu0 0.0
  %132 = vmatpush1.msra.mxu0 0.0
  %133 = vmatprep.subr.mxu0 0.0
  %134 = vmatpush1.msra.mxu0 0.0
  %135 = vmatprep.subr.mxu0 0.0
  %136 = vmatpush1.msra.mxu0 0.0
  %137 = vmatprep.subr.mxu0 0.0
  %138 = vmatpush1.msra.mxu0 0.0
  %139 = vmatprep.subr.mxu0 0.0
  %140 = vmatpush1.msra.mxu0 0.0
  %141 = vmatprep.subr.mxu0 0.0
  %142 = vmatpush1.msra.mxu0 0.0
  %143 = vmatprep.subr.mxu0 0.0
  %144 = vmatpush1.msra.mxu0 0.0
  %145 = vmatprep.subr.mxu0 0.0
  %146 = vmatpush1.msra.mxu0 0.0
  %147 = vmatprep.subr.mxu0 0.0
  %148 = vmatpush1.msra.mxu0 0.0
  %149 = vmatprep.subr.mxu0 0.0
  %150 = vmatpush1.msra.mxu0 0.0
  %151 = vmatprep.subr.mxu0 0.0
  %152 = vmatpush1.msra.mxu0 0.0
  %153 = vmatprep.subr.mxu0 0.0
  %154 = vmatpush1.msra.mxu0 0.0
  %155 = vmatprep.subr.mxu0 0.0
  %156 = vmatpush1.msra.mxu0 0.0
  %157 = vmatprep.subr.mxu0 0.0
  %158 = vmatpush1.msra.mxu0 0.0
  %159 = vmatprep.subr.mxu0 0.0
  %160 = vmatpush1.msra.mxu0 0.0
  %161 = vmatprep.subr.mxu0 0.0
  %162 = vmatpush1.msra.mxu0 0.0
  %163 = vmatprep.subr.mxu0 0.0
  %164 = vmatpush1.msra.mxu0 0.0
  %165 = vmatprep.subr.mxu0 0.0
  %166 = vmatpush1.msra.mxu0 0.0
  %167 = vmatprep.subr.mxu0 0.0
  %168 = vmatpush1.msra.mxu0 0.0
  %169 = vmatprep.subr.mxu0 0.0
  %170 = vmatpush1.msra.mxu0 0.0
  %171 = vmatprep.subr.mxu0 0.0
  %172 = vmatpush1.msra.mxu0 0.0
  %173 = vmatprep.subr.mxu0 0.0
  %174 = vmatpush1.msra.mxu0 0.0
  %175 = vmatprep.subr.mxu0 0.0
  %176 = vmatpush1.msra.mxu0 0.0
  %177 = vmatprep.subr.mxu0 0.0
  %178 = vmatpush1.msra.mxu0 0.0
  %179 = vmatprep.subr.mxu0 0.0
  %180 = vmatpush1.msra.mxu0 0.0
  %181 = vmatprep.subr.mxu0 0.0
  %182 = vmatpush1.msra.mxu0 0.0
  %183 = vmatprep.subr.mxu0 0.0
  %184 = vmatpush1.msra.mxu0 0.0
  %185 = vmatprep.mubr.f32.mxu0 0.0
  %186 = vmatmul.mubr.f32.gmra.mrb[0].mxu0 %v48
  %v187 = vpop.f32.mrb[0].mxu0
  %v188 = vadd.f32 0.0, %v187
  %v189 = vpop.f32.mrb[0].mxu0
  %v190 = vadd.f32 0.0, %v189
  %191 = vdwg.mxu0
  %vm192 = vcmask 64512
  %v194 = vsel %vm192, %v32, 0
  %196 = vmatprep.subr.mxu0 %v34
  %197 = vmatpush1.msra.mxu0 %v33
  %198 = vmatprep.subr.mxu0 0.0
  %199 = vmatpush1.msra.mxu0 0.0
  %200 = vmatprep.subr.mxu0 0.0
  %201 = vmatpush1.msra.mxu0 0.0
  %202 = vmatprep.subr.mxu0 0.0
  %203 = vmatpush1.msra.mxu0 0.0
  %204 = vmatprep.subr.mxu0 0.0
  %205 = vmatpush1.msra.mxu0 0.0
  %206 = vmatprep.subr.mxu0 0.0
  %207 = vmatpush1.msra.mxu0 0.0
  %208 = vmatprep.subr.mxu0 0.0
  %209 = vmatpush1.msra.mxu0 0.0
  %210 = vmatprep.subr.mxu0 0.0
  %211 = vmatpush1.msra.mxu0 0.0
  %212 = vmatprep.subr.mxu0 0.0
  %213 = vmatpush1.msra.mxu0 0.0
  %214 = vmatprep.subr.mxu0 0.0
  %215 = vmatpush1.msra.mxu0 0.0
  %216 = vmatprep.subr.mxu0 0.0
  %217 = vmatpush1.msra.mxu0 0.0
  %218 = vmatprep.subr.mxu0 0.0
  %219 = vmatpush1.msra.mxu0 0.0
  %220 = vmatprep.subr.mxu0 0.0
  %221 = vmatpush1.msra.mxu0 0.0
  %222 = vmatprep.subr.mxu0 0.0
  %223 = vmatpush1.msra.mxu0 0.0
  %224 = vmatprep.subr.mxu0 0.0
  %225 = vmatpush1.msra.mxu0 0.0
  %226 = vmatprep.subr.mxu0 0.0
  %227 = vmatpush1.msra.mxu0 0.0
  %228 = vmatprep.subr.mxu0 0.0
  %229 = vmatpush1.msra.mxu0 0.0
  %230 = vmatprep.subr.mxu0 0.0
  %231 = vmatpush1.msra.mxu0 0.0
  %232 = vmatprep.subr.mxu0 0.0
  %233 = vmatpush1.msra.mxu0 0.0
  %234 = vmatprep.subr.mxu0 0.0
  %235 = vmatpush1.msra.mxu0 0.0
  %236 = vmatprep.subr.mxu0 0.0
  %237 = vmatpush1.msra.mxu0 0.0
  %238 = vmatprep.subr.mxu0 0.0
  %239 = vmatpush1.msra.mxu0 0.0
  %240 = vmatprep.subr.mxu0 0.0
  %241 = vmatpush1.msra.mxu0 0.0
  %242 = vmatprep.subr.mxu0 0.0
  %243 = vmatpush1.msra.mxu0 0.0
  %244 = vmatprep.subr.mxu0 0.0
  %245 = vmatpush1.msra.mxu0 0.0
  %246 = vmatprep.subr.mxu0 0.0
  %247 = vmatpush1.msra.mxu0 0.0
  %248 = vmatprep.subr.mxu0 0.0
  %249 = vmatpush1.msra.mxu0 0.0
  %250 = vmatprep.subr.mxu0 0.0
  %251 = vmatpush1.msra.mxu0 0.0
  %252 = vmatprep.subr.mxu0 0.0
  %253 = vmatpush1.msra.mxu0 0.0
  %254 = vmatprep.subr.mxu0 0.0
  %255 = vmatpush1.msra.mxu0 0.0
  %256 = vmatprep.subr.mxu0 0.0
  %257 = vmatpush1.msra.mxu0 0.0
  %258 = vmatprep.subr.mxu0 0.0
  %259 = vmatpush1.msra.mxu0 0.0
  %260 = vmatprep.mubr.f32.mxu0 0.0
  %261 = vmatmul.mubr.f32.gmra.mrb[0].mxu0 %v194
  %v262 = vpop.f32.mrb[0].mxu0
  %v263 = vadd.f32 %v117, %v262
  %v264 = vpop.f32.mrb[0].mxu0
  %v265 = vadd.f32 %v119, %v264
  %266 = vdwg.mxu0
  %267 = vmatprep.subr.mxu0 %v36
  %268 = vmatpush1.msra.mxu0 %v35
  %269 = vmatprep.subr.mxu0 0.0
  %270 = vmatpush1.msra.mxu0 0.0
  %271 = vmatprep.subr.mxu0 0.0
  %272 = vmatpush1.msra.mxu0 0.0
  %273 = vmatprep.subr.mxu0 0.0
  %274 = vmatpush1.msra.mxu0 0.0
  %275 = vmatprep.subr.mxu0 0.0
  %276 = vmatpush1.msra.mxu0 0.0
  %277 = vmatprep.subr.mxu0 0.0
  %278 = vmatpush1.msra.mxu0 0.0
  %279 = vmatprep.subr.mxu0 0.0
  %280 = vmatpush1.msra.mxu0 0.0
  %281 = vmatprep.subr.mxu0 0.0
  %282 = vmatpush1.msra.mxu0 0.0
  %283 = vmatprep.subr.mxu0 0.0
  %284 = vmatpush1.msra.mxu0 0.0
  %285 = vmatprep.subr.mxu0 0.0
  %286 = vmatpush1.msra.mxu0 0.0
  %287 = vmatprep.subr.mxu0 0.0
  %288 = vmatpush1.msra.mxu0 0.0
  %289 = vmatprep.subr.mxu0 0.0
  %290 = vmatpush1.msra.mxu0 0.0
  %291 = vmatprep.subr.mxu0 0.0
  %292 = vmatpush1.msra.mxu0 0.0
  %293 = vmatprep.subr.mxu0 0.0
  %294 = vmatpush1.msra.mxu0 0.0
  %295 = vmatprep.subr.mxu0 0.0
  %296 = vmatpush1.msra.mxu0 0.0
  %297 = vmatprep.subr.mxu0 0.0
  %298 = vmatpush1.msra.mxu0 0.0
  %299 = vmatprep.subr.mxu0 0.0
  %300 = vmatpush1.msra.mxu0 0.0
  %301 = vmatprep.subr.mxu0 0.0
  %302 = vmatpush1.msra.mxu0 0.0
  %303 = vmatprep.subr.mxu0 0.0
  %304 = vmatpush1.msra.mxu0 0.0
  %305 = vmatprep.subr.mxu0 0.0
  %306 = vmatpush1.msra.mxu0 0.0
  %307 = vmatprep.subr.mxu0 0.0
  %308 = vmatpush1.msra.mxu0 0.0
  %309 = vmatprep.subr.mxu0 0.0
  %310 = vmatpush1.msra.mxu0 0.0
  %311 = vmatprep.subr.mxu0 0.0
  %312 = vmatpush1.msra.mxu0 0.0
  %313 = vmatprep.subr.mxu0 0.0
  %314 = vmatpush1.msra.mxu0 0.0
  %315 = vmatprep.subr.mxu0 0.0
  %316 = vmatpush1.msra.mxu0 0.0
  %317 = vmatprep.subr.mxu0 0.0
  %318 = vmatpush1.msra.mxu0 0.0
  %319 = vmatprep.subr.mxu0 0.0
  %320 = vmatpush1.msra.mxu0 0.0
  %321 = vmatprep.subr.mxu0 0.0
  %322 = vmatpush1.msra.mxu0 0.0
  %323 = vmatprep.subr.mxu0 0.0
  %324 = vmatpush1.msra.mxu0 0.0
  %325 = vmatprep.subr.mxu0 0.0
  %326 = vmatpush1.msra.mxu0 0.0
  %327 = vmatprep.subr.mxu0 0.0
  %328 = vmatpush1.msra.mxu0 0.0
  %329 = vmatprep.subr.mxu0 0.0
  %330 = vmatpush1.msra.mxu0 0.0
  %331 = vmatprep.mubr.f32.mxu0 0.0
  %332 = vmatmul.mubr.f32.gmra.mrb[0].mxu0 %v194
  %v333 = vpop.f32.mrb[0].mxu0
  %v334 = vadd.f32 %v188, %v333
  %v335 = vpop.f32.mrb[0].mxu0
  %v336 = vadd.f32 %v190, %v335
  %337 = vdwg.mxu0
  %v338 = vld [vmem:[%s4] sm:$0xf]
  %v340 = vlaneseq
  %v341 = vshrl.u32 %v340, 7
  %v342 = vsub.s32 0, %v341
  %v343 = vrot.slane %v338, %v342
  %v344 = vlaneseq
  %v345 = vshrl.u32 %v344, 7
  %v346 = vsub.s32 1, %v345
  %v347 = vrot.slane %v338, %v346
  %v348 = vlaneseq
  %v349 = vshrl.u32 %v348, 7
  %v350 = vsub.s32 2, %v349
  %v351 = vrot.slane %v338, %v350
  %v352 = vlaneseq
  %v353 = vshrl.u32 %v352, 7
  %v354 = vsub.s32 3, %v353
  %v355 = vrot.slane %v338, %v354
  %v360 = vadd.f32 %v263, %v343
  %v361 = vadd.f32 %v265, %v347
  %v362 = vadd.f32 %v334, %v351
  %v363 = vadd.f32 %v336, %v355
  %v364 = vmax.f32 %v360, 0.0
  %v365 = vmax.f32 %v361, 0.0
  %v366 = vmax.f32 %v362, 0.0
  %v367 = vmax.f32 %v363, 0.0
  %v368 = vld [vmem:[%s5] sm:$0xff]
  %v369 = vld [vmem:[%s5 + $0x8] sm:$0xff]
  %v370 = vld [vmem:[%s5 + $0x10] sm:$0xff]
  %v371 = vld [vmem:[%s5 + $0x18] sm:$0xff]
  %v372 = vld [vmem:[%s5 + $0x20] sm:$0xff]
  %v373 = vld [vmem:[%s5 + $0x28] sm:$0xff]
  %v374 = vld [vmem:[%s5 + $0x30] sm:$0xff]
  %v375 = vld [vmem:[%s5 + $0x38] sm:$0xff]
  %v376 = vld [vmem:[%s5 + $0x40] sm:$0xff]
  %v377 = vld [vmem:[%s5 + $0x48] sm:$0xff]
  %v378 = vld [vmem:[%s5 + $0x50] sm:$0xff]
  %v379 = vld [vmem:[%s5 + $0x58] sm:$0xff]
  %v380 = vld [vmem:[%s5 + $0x60] sm:$0xff]
  %v381 = vld [vmem:[%s5 + $0x68] sm:$0xff]
  %v382 = vld [vmem:[%s5 + $0x70] sm:$0xff]
  %v383 = vld [vmem:[%s5 + $0x78] sm:$0xff]
  %v384 = vld [vmem:[%s5 + $0x80] sm:$0xff]
  %v385 = vld [vmem:[%s5 + $0x88] sm:$0xff]
  %v386 = vld [vmem:[%s5 + $0x90] sm:$0xff]
  %v387 = vld [vmem:[%s5 + $0x98] sm:$0xff]
  %v388 = vld [vmem:[%s5 + $0xa0] sm:$0xff]
  %v389 = vld [vmem:[%s5 + $0xa8] sm:$0xff]
  %v390 = vld [vmem:[%s5 + $0xb0] sm:$0xff]
  %v391 = vld [vmem:[%s5 + $0xb8] sm:$0xff]
  %v392 = vld [vmem:[%s5 + $0xc0] sm:$0xff]
  %v393 = vld [vmem:[%s5 + $0xc8] sm:$0xff]
  %v394 = vld [vmem:[%s5 + $0xd0] sm:$0xff]
  %v395 = vld [vmem:[%s5 + $0xd8] sm:$0xff]
  %v396 = vld [vmem:[%s5 + $0xe0] sm:$0xff]
  %v397 = vld [vmem:[%s5 + $0xe8] sm:$0xff]
  %v398 = vld [vmem:[%s5 + $0xf0] sm:$0xff]
  %v399 = vld [vmem:[%s5 + $0xf8] sm:$0xff]
  %v400 = vld [vmem:[%s5 + $0x100] sm:$0xff]
  %v401 = vld [vmem:[%s5 + $0x108] sm:$0xff]
  %v402 = vld [vmem:[%s5 + $0x110] sm:$0xff]
  %v403 = vld [vmem:[%s5 + $0x118] sm:$0xff]
  %v404 = vld [vmem:[%s5 + $0x120] sm:$0xff]
  %v405 = vld [vmem:[%s5 + $0x128] sm:$0xff]
  %v406 = vld [vmem:[%s5 + $0x130] sm:$0xff]
  %v407 = vld [vmem:[%s5 + $0x138] sm:$0xff]
  %v408 = vld [vmem:[%s5 + $0x140] sm:$0xff]
  %v409 = vld [vmem:[%s5 + $0x148] sm:$0xff]
  %v410 = vld [vmem:[%s5 + $0x150] sm:$0xff]
  %v411 = vld [vmem:[%s5 + $0x158] sm:$0xff]
  %v412 = vld [vmem:[%s5 + $0x160] sm:$0xff]
  %v413 = vld [vmem:[%s5 + $0x168] sm:$0xff]
  %v414 = vld [vmem:[%s5 + $0x170] sm:$0xff]
  %v415 = vld [vmem:[%s5 + $0x178] sm:$0xff]
  %v416 = vld [vmem:[%s5 + $0x180] sm:$0xff]
  %v417 = vld [vmem:[%s5 + $0x188] sm:$0xff]
  %v418 = vld [vmem:[%s5 + $0x190] sm:$0xff]
  %v419 = vld [vmem:[%s5 + $0x198] sm:$0xff]
  %v420 = vld [vmem:[%s5 + $0x1a0] sm:$0xff]
  %v421 = vld [vmem:[%s5 + $0x1a8] sm:$0xff]
  %v422 = vld [vmem:[%s5 + $0x1b0] sm:$0xff]
  %v423 = vld [vmem:[%s5 + $0x1b8] sm:$0xff]
  %v424 = vld [vmem:[%s5 + $0x1c0] sm:$0xff]
  %v425 = vld [vmem:[%s5 + $0x1c8] sm:$0xff]
  %v426 = vld [vmem:[%s5 + $0x1d0] sm:$0xff]
  %v427 = vld [vmem:[%s5 + $0x1d8] sm:$0xff]
  %v428 = vld [vmem:[%s5 + $0x1e0] sm:$0xff]
  %v429 = vld [vmem:[%s5 + $0x1e8] sm:$0xff]
  %v430 = vld [vmem:[%s5 + $0x1f0] sm:$0xff]
  %v431 = vld [vmem:[%s5 + $0x1f8] sm:$0xff]
  %v432 = vld [vmem:[%s5 + $0x200] sm:$0xff]
  %v433 = vld [vmem:[%s5 + $0x208] sm:$0xff]
  %v434 = vld [vmem:[%s5 + $0x210] sm:$0xff]
  %v435 = vld [vmem:[%s5 + $0x218] sm:$0xff]
  %v436 = vld [vmem:[%s5 + $0x220] sm:$0xff]
  %v437 = vld [vmem:[%s5 + $0x228] sm:$0xff]
  %v438 = vld [vmem:[%s5 + $0x230] sm:$0xff]
  %v439 = vld [vmem:[%s5 + $0x238] sm:$0xff]
  %v440 = vld [vmem:[%s5 + $0x240] sm:$0xff]
  %v441 = vld [vmem:[%s5 + $0x248] sm:$0xff]
  %v442 = vld [vmem:[%s5 + $0x250] sm:$0xff]
  %v443 = vld [vmem:[%s5 + $0x258] sm:$0xff]
  %v444 = vld [vmem:[%s5 + $0x260] sm:$0xff]
  %v445 = vld [vmem:[%s5 + $0x268] sm:$0xff]
  %v446 = vld [vmem:[%s5 + $0x270] sm:$0xff]
  %v447 = vld [vmem:[%s5 + $0x278] sm:$0xff]
  %v448 = vld [vmem:[%s5 + $0x280] sm:$0xff]
  %v449 = vld [vmem:[%s5 + $0x288] sm:$0xff]
  %v450 = vld [vmem:[%s5 + $0x290] sm:$0xff]
  %v451 = vld [vmem:[%s5 + $0x298] sm:$0xff]
  %v452 = vld [vmem:[%s5 + $0x2a0] sm:$0xff]
  %v453 = vld [vmem:[%s5 + $0x2a8] sm:$0xff]
  %v454 = vld [vmem:[%s5 + $0x2b0] sm:$0xff]
  %v455 = vld [vmem:[%s5 + $0x2b8] sm:$0xff]
  %v456 = vld [vmem:[%s5 + $0x2c0] sm:$0xff]
  %v457 = vld [vmem:[%s5 + $0x2c8] sm:$0xff]
  %v458 = vld [vmem:[%s5 + $0x2d0] sm:$0xff]
  %v459 = vld [vmem:[%s5 + $0x2d8] sm:$0xff]
  %v460 = vld [vmem:[%s5 + $0x2e0] sm:$0xff]
  %v461 = vld [vmem:[%s5 + $0x2e8] sm:$0xff]
  %v462 = vld [vmem:[%s5 + $0x2f0] sm:$0xff]
  %v463 = vld [vmem:[%s5 + $0x2f8] sm:$0xff]
  %v464 = vld [vmem:[%s5 + $0x300] sm:$0xff]
  %v465 = vld [vmem:[%s5 + $0x308] sm:$0xff]
  %v466 = vld [vmem:[%s5 + $0x310] sm:$0xff]
  %v467 = vld [vmem:[%s5 + $0x318] sm:$0xff]
  %v468 = vld [vmem:[%s5 + $0x320] sm:$0xff]
  %v469 = vld [vmem:[%s5 + $0x328] sm:$0xff]
  %v470 = vld [vmem:[%s5 + $0x330] sm:$0xff]
  %v471 = vld [vmem:[%s5 + $0x338] sm:$0xff]
  %v472 = vld [vmem:[%s5 + $0x340] sm:$0xff]
  %v473 = vld [vmem:[%s5 + $0x348] sm:$0xff]
  %v474 = vld [vmem:[%s5 + $0x350] sm:$0xff]
  %v475 = vld [vmem:[%s5 + $0x358] sm:$0xff]
  %v476 = vld [vmem:[%s5 + $0x360] sm:$0xff]
  %v477 = vld [vmem:[%s5 + $0x368] sm:$0xff]
  %v478 = vld [vmem:[%s5 + $0x370] sm:$0xff]
  %v479 = vld [vmem:[%s5 + $0x378] sm:$0xff]
  %v480 = vld [vmem:[%s5 + $0x380] sm:$0xff]
  %v481 = vld [vmem:[%s5 + $0x388] sm:$0xff]
  %v482 = vld [vmem:[%s5 + $0x390] sm:$0xff]
  %v483 = vld [vmem:[%s5 + $0x398] sm:$0xff]
  %v484 = vld [vmem:[%s5 + $0x3a0] sm:$0xff]
  %v485 = vld [vmem:[%s5 + $0x3a8] sm:$0xff]
  %v486 = vld [vmem:[%s5 + $0x3b0] sm:$0xff]
  %v487 = vld [vmem:[%s5 + $0x3b8] sm:$0xff]
  %v488 = vld [vmem:[%s5 + $0x3c0] sm:$0xff]
  %v489 = vld [vmem:[%s5 + $0x3c8] sm:$0xff]
  %v490 = vld [vmem:[%s5 + $0x3d0] sm:$0xff]
  %v491 = vld [vmem:[%s5 + $0x3d8] sm:$0xff]
  %v492 = vld [vmem:[%s5 + $0x3e0] sm:$0xff]
  %v493 = vld [vmem:[%s5 + $0x3e8] sm:$0xff]
  %v494 = vld [vmem:[%s5 + $0x3f0] sm:$0xff]
  %v495 = vld [vmem:[%s5 + $0x3f8] sm:$0xff]
  %v496 = vld [vmem:[%s6] sm:$0x3]
  %v498 = vlaneseq
  %v499 = vshrl.u32 %v498, 7
  %v500 = vsub.s32 0, %v499
  %v501 = vrot.slane %v496, %v500
  %v502 = vlaneseq
  %v503 = vshrl.u32 %v502, 7
  %v504 = vsub.s32 1, %v503
  %v505 = vrot.slane %v496, %v504
  %508 = vmatprep.subr.mxu0 %v369
  %509 = vmatpush1.msra.mxu0 %v368
  %510 = vmatprep.subr.mxu0 %v371
  %511 = vmatpush1.msra.mxu0 %v370
  %512 = vmatprep.subr.mxu0 %v373
  %513 = vmatpush1.msra.mxu0 %v372
  %514 = vmatprep.subr.mxu0 %v375
  %515 = vmatpush1.msra.mxu0 %v374
  %516 = vmatprep.subr.mxu0 %v377
  %517 = vmatpush1.msra.mxu0 %v376
  %518 = vmatprep.subr.mxu0 %v379
  %519 = vmatpush1.msra.mxu0 %v378
  %520 = vmatprep.subr.mxu0 %v381
  %521 = vmatpush1.msra.mxu0 %v380
  %522 = vmatprep.subr.mxu0 %v383
  %523 = vmatpush1.msra.mxu0 %v382
  %524 = vmatprep.subr.mxu0 %v385
  %525 = vmatpush1.msra.mxu0 %v384
  %526 = vmatprep.subr.mxu0 %v387
  %527 = vmatpush1.msra.mxu0 %v386
  %528 = vmatprep.subr.mxu0 %v389
  %529 = vmatpush1.msra.mxu0 %v388
  %530 = vmatprep.subr.mxu0 %v391
  %531 = vmatpush1.msra.mxu0 %v390
  %532 = vmatprep.subr.mxu0 %v393
  %533 = vmatpush1.msra.mxu0 %v392
  %534 = vmatprep.subr.mxu0 %v395
  %535 = vmatpush1.msra.mxu0 %v394
  %536 = vmatprep.subr.mxu0 %v397
  %537 = vmatpush1.msra.mxu0 %v396
  %538 = vmatprep.subr.mxu0 %v399
  %539 = vmatpush1.msra.mxu0 %v398
  %540 = vmatprep.subr.mxu0 %v401
  %541 = vmatpush1.msra.mxu0 %v400
  %542 = vmatprep.subr.mxu0 %v403
  %543 = vmatpush1.msra.mxu0 %v402
  %544 = vmatprep.subr.mxu0 %v405
  %545 = vmatpush1.msra.mxu0 %v404
  %546 = vmatprep.subr.mxu0 %v407
  %547 = vmatpush1.msra.mxu0 %v406
  %548 = vmatprep.subr.mxu0 %v409
  %549 = vmatpush1.msra.mxu0 %v408
  %550 = vmatprep.subr.mxu0 %v411
  %551 = vmatpush1.msra.mxu0 %v410
  %552 = vmatprep.subr.mxu0 %v413
  %553 = vmatpush1.msra.mxu0 %v412
  %554 = vmatprep.subr.mxu0 %v415
  %555 = vmatpush1.msra.mxu0 %v414
  %556 = vmatprep.subr.mxu0 %v417
  %557 = vmatpush1.msra.mxu0 %v416
  %558 = vmatprep.subr.mxu0 %v419
  %559 = vmatpush1.msra.mxu0 %v418
  %560 = vmatprep.subr.mxu0 %v421
  %561 = vmatpush1.msra.mxu0 %v420
  %562 = vmatprep.subr.mxu0 %v423
  %563 = vmatpush1.msra.mxu0 %v422
  %564 = vmatprep.subr.mxu0 %v425
  %565 = vmatpush1.msra.mxu0 %v424
  %566 = vmatprep.subr.mxu0 %v427
  %567 = vmatpush1.msra.mxu0 %v426
  %568 = vmatprep.subr.mxu0 %v429
  %569 = vmatpush1.msra.mxu0 %v428
  %570 = vmatprep.subr.mxu0 %v431
  %571 = vmatpush1.msra.mxu0 %v430
  %572 = vmatprep.mubr.f32.mxu0 %v365
  %573 = vmatmul.mubr.f32.gmra.mrb[0].mxu0 %v364
  %v574 = vpop.f32.mrb[0].mxu0
  %v575 = vadd.f32 %v501, %v574
  %v576 = vpop.f32.mrb[0].mxu0
  %v577 = vadd.f32 %v505, %v576
  %578 = vdwg.mxu0
  %579 = vmatprep.subr.mxu0 %v433
  %580 = vmatpush1.msra.mxu0 %v432
  %581 = vmatprep.subr.mxu0 %v435
  %582 = vmatpush1.msra.mxu0 %v434
  %583 = vmatprep.subr.mxu0 %v437
  %584 = vmatpush1.msra.mxu0 %v436
  %585 = vmatprep.subr.mxu0 %v439
  %586 = vmatpush1.msra.mxu0 %v438
  %587 = vmatprep.subr.mxu0 %v441
  %588 = vmatpush1.msra.mxu0 %v440
  %589 = vmatprep.subr.mxu0 %v443
  %590 = vmatpush1.msra.mxu0 %v442
  %591 = vmatprep.subr.mxu0 %v445
  %592 = vmatpush1.msra.mxu0 %v444
  %593 = vmatprep.subr.mxu0 %v447
  %594 = vmatpush1.msra.mxu0 %v446
  %595 = vmatprep.subr.mxu0 %v449
  %596 = vmatpush1.msra.mxu0 %v448
  %597 = vmatprep.subr.mxu0 %v451
  %598 = vmatpush1.msra.mxu0 %v450
  %599 = vmatprep.subr.mxu0 %v453
  %600 = vmatpush1.msra.mxu0 %v452
  %601 = vmatprep.subr.mxu0 %v455
  %602 = vmatpush1.msra.mxu0 %v454
  %603 = vmatprep.subr.mxu0 %v457
  %604 = vmatpush1.msra.mxu0 %v456
  %605 = vmatprep.subr.mxu0 %v459
  %606 = vmatpush1.msra.mxu0 %v458
  %607 = vmatprep.subr.mxu0 %v461
  %608 = vmatpush1.msra.mxu0 %v460
  %609 = vmatprep.subr.mxu0 %v463
  %610 = vmatpush1.msra.mxu0 %v462
  %611 = vmatprep.subr.mxu0 %v465
  %612 = vmatpush1.msra.mxu0 %v464
  %613 = vmatprep.subr.mxu0 %v467
  %614 = vmatpush1.msra.mxu0 %v466
  %615 = vmatprep.subr.mxu0 %v469
  %616 = vmatpush1.msra.mxu0 %v468
  %617 = vmatprep.subr.mxu0 %v471
  %618 = vmatpush1.msra.mxu0 %v470
  %619 = vmatprep.subr.mxu0 %v473
  %620 = vmatpush1.msra.mxu0 %v472
  %621 = vmatprep.subr.mxu0 %v475
  %622 = vmatpush1.msra.mxu0 %v474
  %623 = vmatprep.subr.mxu0 %v477
  %624 = vmatpush1.msra.mxu0 %v476
  %625 = vmatprep.subr.mxu0 %v479
  %626 = vmatpush1.msra.mxu0 %v478
  %627 = vmatprep.subr.mxu0 %v481
  %628 = vmatpush1.msra.mxu0 %v480
  %629 = vmatprep.subr.mxu0 %v483
  %630 = vmatpush1.msra.mxu0 %v482
  %631 = vmatprep.subr.mxu0 %v485
  %632 = vmatpush1.msra.mxu0 %v484
  %633 = vmatprep.subr.mxu0 %v487
  %634 = vmatpush1.msra.mxu0 %v486
  %635 = vmatprep.subr.mxu0 %v489
  %636 = vmatpush1.msra.mxu0 %v488
  %637 = vmatprep.subr.mxu0 %v491
  %638 = vmatpush1.msra.mxu0 %v490
  %639 = vmatprep.subr.mxu0 %v493
  %640 = vmatpush1.msra.mxu0 %v492
  %641 = vmatprep.subr.mxu0 %v495
  %642 = vmatpush1.msra.mxu0 %v494
  %643 = vmatprep.mubr.f32.mxu0 %v367
  %644 = vmatmul.mubr.f32.gmra.mrb[0].mxu0 %v366
  %v645 = vpop.f32.mrb[0].mxu0
  %v646 = vadd.f32 %v575, %v645
  %v647 = vpop.f32.mrb[0].mxu0
  %v648 = vadd.f32 %v577, %v647
  %649 = vdwg.mxu0
  %v650 = vmax.f32 %v646, 0.0
  %v651 = vmax.f32 %v648, 0.0
  %v652 = vld [vmem:[%s7] sm:$0xff]
  %v653 = vld [vmem:[%s7 + $0x8] sm:$0xff]
  %v654 = vld [vmem:[%s7 + $0x10] sm:$0xff]
  %v655 = vld [vmem:[%s7 + $0x18] sm:$0xff]
  %v656 = vld [vmem:[%s7 + $0x20] sm:$0xff]
  %v657 = vld [vmem:[%s7 + $0x28] sm:$0xff]
  %v658 = vld [vmem:[%s7 + $0x30] sm:$0xff]
  %v659 = vld [vmem:[%s7 + $0x38] sm:$0xff]
  %v660 = vld [vmem:[%s7 + $0x40] sm:$0xff]
  %v661 = vld [vmem:[%s7 + $0x48] sm:$0xff]
  %v662 = vld [vmem:[%s7 + $0x50] sm:$0xff]
  %v663 = vld [vmem:[%s7 + $0x58] sm:$0xff]
  %v664 = vld [vmem:[%s7 + $0x60] sm:$0xff]
  %v665 = vld [vmem:[%s7 + $0x68] sm:$0xff]
  %v666 = vld [vmem:[%s7 + $0x70] sm:$0xff]
  %v667 = vld [vmem:[%s7 + $0x78] sm:$0xff]
  %v668 = vld [vmem:[%s7 + $0x80] sm:$0xff]
  %v669 = vld [vmem:[%s7 + $0x88] sm:$0xff]
  %v670 = vld [vmem:[%s7 + $0x90] sm:$0xff]
  %v671 = vld [vmem:[%s7 + $0x98] sm:$0xff]
  %v672 = vld [vmem:[%s7 + $0xa0] sm:$0xff]
  %v673 = vld [vmem:[%s7 + $0xa8] sm:$0xff]
  %v674 = vld [vmem:[%s7 + $0xb0] sm:$0xff]
  %v675 = vld [vmem:[%s7 + $0xb8] sm:$0xff]
  %v676 = vld [vmem:[%s7 + $0xc0] sm:$0xff]
  %v677 = vld [vmem:[%s7 + $0xc8] sm:$0xff]
  %v678 = vld [vmem:[%s7 + $0xd0] sm:$0xff]
  %v679 = vld [vmem:[%s7 + $0xd8] sm:$0xff]
  %v680 = vld [vmem:[%s7 + $0xe0] sm:$0xff]
  %v681 = vld [vmem:[%s7 + $0xe8] sm:$0xff]
  %v682 = vld [vmem:[%s7 + $0xf0] sm:$0xff]
  %v683 = vld [vmem:[%s7 + $0xf8] sm:$0xff]
  %v684 = vld [vmem:[%s8] sm:$0x1]
  %v686 = vlaneseq
  %v687 = vshrl.u32 %v686, 7
  %v688 = vsub.s32 0, %v687
  %v689 = vrot.slane %v684, %v688
  %691 = vmatprep.subr.mxu0 0.0
  %692 = vmatpush1.msra.mxu0 %v652
  %693 = vmatprep.subr.mxu0 0.0
  %694 = vmatpush1.msra.mxu0 %v653
  %695 = vmatprep.subr.mxu0 0.0
  %696 = vmatpush1.msra.mxu0 %v654
  %697 = vmatprep.subr.mxu0 0.0
  %698 = vmatpush1.msra.mxu0 %v655
  %699 = vmatprep.subr.mxu0 0.0
  %700 = vmatpush1.msra.mxu0 %v656
  %701 = vmatprep.subr.mxu0 0.0
  %702 = vmatpush1.msra.mxu0 %v657
  %703 = vmatprep.subr.mxu0 0.0
  %704 = vmatpush1.msra.mxu0 %v658
  %705 = vmatprep.subr.mxu0 0.0
  %706 = vmatpush1.msra.mxu0 %v659
  %707 = vmatprep.subr.mxu0 0.0
  %708 = vmatpush1.msra.mxu0 %v660
  %709 = vmatprep.subr.mxu0 0.0
  %710 = vmatpush1.msra.mxu0 %v661
  %711 = vmatprep.subr.mxu0 0.0
  %712 = vmatpush1.msra.mxu0 %v662
  %713 = vmatprep.subr.mxu0 0.0
  %714 = vmatpush1.msra.mxu0 %v663
  %715 = vmatprep.subr.mxu0 0.0
  %716 = vmatpush1.msra.mxu0 %v664
  %717 = vmatprep.subr.mxu0 0.0
  %718 = vmatpush1.msra.mxu0 %v665
  %719 = vmatprep.subr.mxu0 0.0
  %720 = vmatpush1.msra.mxu0 %v666
  %721 = vmatprep.subr.mxu0 0.0
  %722 = vmatpush1.msra.mxu0 %v667
  %723 = vmatprep.subr.mxu0 0.0
  %724 = vmatpush1.msra.mxu0 %v668
  %725 = vmatprep.subr.mxu0 0.0
  %726 = vmatpush1.msra.mxu0 %v669
  %727 = vmatprep.subr.mxu0 0.0
  %728 = vmatpush1.msra.mxu0 %v670
  %729 = vmatprep.subr.mxu0 0.0
  %730 = vmatpush1.msra.mxu0 %v671
  %731 = vmatprep.subr.mxu0 0.0
  %732 = vmatpush1.msra.mxu0 %v672
  %733 = vmatprep.subr.mxu0 0.0
  %734 = vmatpush1.msra.mxu0 %v673
  %735 = vmatprep.subr.mxu0 0.0
  %736 = vmatpush1.msra.mxu0 %v674
  %737 = vmatprep.subr.mxu0 0.0
  %738 = vmatpush1.msra.mxu0 %v675
  %739 = vmatprep.subr.mxu0 0.0
  %740 = vmatpush1.msra.mxu0 %v676
  %741 = vmatprep.subr.mxu0 0.0
  %742 = vmatpush1.msra.mxu0 %v677
  %743 = vmatprep.subr.mxu0 0.0
  %744 = vmatpush1.msra.mxu0 %v678
  %745 = vmatprep.subr.mxu0 0.0
  %746 = vmatpush1.msra.mxu0 %v679
  %747 = vmatprep.subr.mxu0 0.0
  %748 = vmatpush1.msra.mxu0 %v680
  %749 = vmatprep.subr.mxu0 0.0
  %750 = vmatpush1.msra.mxu0 %v681
  %751 = vmatprep.subr.mxu0 0.0
  %752 = vmatpush1.msra.mxu0 %v682
  %753 = vmatprep.subr.mxu0 0.0
  %754 = vmatpush1.msra.mxu0 %v683
  %755 = vmatprep.mubr.f32.mxu0 %v651
  %756 = vmatmul.mubr.f32.gmra.mrb[0].mxu0 %v650
  %v757 = vpop.f32.mrb[0].mxu0
  %v758 = vadd.f32 %v689, %v757
  %v759 = vpop.f32.mrb[0].mxu0
  %760 = vdwg.mxu0
  %761 = vst [vmem:[%s9] sm:$0x3] %v758
  // Predicated region
  $region38: #{event_encoder_forward.1} parent=0 // pred_check
    _
  $region39: #{event_encoder_forward.1} parent=0 // pred_check_branch
    %763 = sbr.rel (0) target = $region41
  $region40: #{event_encoder_forward.1} parent=0 // pred_region
    _
  $region41: #{event_encoder_forward.1} parent=0 // pred_fallthru
    _
  // Predicated region
  $region42: #{event_encoder_forward.1} parent=0 // pred_check
    _
  $region43: #{event_encoder_forward.1} parent=0 // pred_check_branch
    %765 = sbr.rel (0) target = $region45
  $region44: #{event_encoder_forward.1} parent=0 // pred_region
    _
  $region45: #{event_encoder_forward.1} parent=0 // pred_fallthru
    _

</llo_original>
